<compile_context>
chip_gen: v7x
topology: tpu7x:2x2x1
jax: 0.10.0
libtpu: 0.0.40
codegen_flags: <defaults>
</compile_context>

<pallas_src>
import jax
import jax.numpy as jnp
from jax.experimental import pallas as pl
from jax.experimental.pallas import tpu as pltpu

_LANE = 128
_MIN_PALLAS_BYTES = 4 * 1024 * 1024   # below this, XLA fused elementwise is at roofline
_MAX_SAMPLES_PER_BLOCK = 256          # (SB,1,1) noise block pads to ~SB*4 KiB of VMEM


def _target_tile_bytes():
    # Generation-aware per-step payload target.  v7x (64 MiB VMEM/TC,
    # ~3.2 TB/s HBM) wants ~4 MiB tiles to hide the ~0.35 us per-grid-step
    # overhead; v5e/v6e are already near roofline at 2 MiB.  Double-buffered
    # in+out at 4 MiB tiles = 16 MiB, inside v7x's 32 MiB scoped default.
    try:
        info = pltpu.get_tpu_info()
        vmem = getattr(info, "vmem_capacity_bytes", None)
        if vmem is not None and vmem <= 64 * 1024 * 1024:   # v7x
            return 4 * 1024 * 1024
    except Exception:
        pass
    return 2 * 1024 * 1024                                   # v5e / v6e


def _intensity_kernel(noise_ref, x_ref, o_ref):
    # noise_ref: (SB, 1, 1) per-sample factors, already in x.dtype (VMEM)
    # x_ref / o_ref: (SB, TR, 128) lane-dense pixel tiles (VMEM)
    o_ref[...] = (x_ref[...] * noise_ref[...]).astype(o_ref.dtype)


def intensity_forward(x, r, scale, *, force_pallas=False, donate_x=False):
    """x: (B, C, H, W); r: (B,) standard-normal draw; scale: python float."""
    B, C, H, W = x.shape
    n = C * H * W
    itemsize = jnp.dtype(x.dtype).itemsize

    # Per-sample scalar work (B clamps + mads) stays in the wrapper.  Cast the
    # factor to x.dtype so kernel and fallback multiply in the same precision.
    noise = (1.0 + jnp.float32(scale)
             * jnp.clip(r.astype(jnp.float32), -2.0, 2.0)).astype(x.dtype)

    total_bytes = B * n * itemsize
    if n % _LANE != 0 or (total_bytes < _MIN_PALLAS_BYTES and not force_pallas):
        # TODO(synk): shapes whose C*H*W is not a multiple of 128 (e.g. 3x84x84)
        # have no clean lane-dense layout without a padding copy; this
        # bandwidth-bound broadcast multiply is already at roofline in XLA.
        return x * noise.reshape(B, 1, 1, 1)

    rows = n // _LANE
    x2 = x.reshape(B, rows, _LANE)       # contiguous row-major -> free reshape
    noise3 = noise.reshape(B, 1, 1)

    target_rows = max(8, _target_tile_bytes() // (_LANE * itemsize))

    if rows >= target_rows:
        # Big per-sample payload: tile rows within each sample.
        sb = 1
        tr = target_rows                 # power-of-two multiple of 8/16/32
    else:
        # Small per-sample payload: fuse several samples per grid step so the
        # per-step DMA stays MiB-sized instead of pure overhead.
        tr = rows                        # full extent -> always a legal block dim
        sb = max(1, min(target_rows // rows, B, _MAX_SAMPLES_PER_BLOCK))
        if B >= 2:
            sb = min(sb, -(-B // 2))     # keep >=2 grid steps for v7x's 2 TCs

    grid = (pl.cdiv(B, sb), pl.cdiv(rows, tr))

    cost = pl.CostEstimate(
        flops=B * n,
        transcendentals=0,
        bytes_accessed=2 * B * n * itemsize + B * itemsize,
    )

    out2 = pl.pallas_call(
        _intensity_kernel,
        out_shape=jax.ShapeDtypeStruct((B, rows, _LANE), x.dtype),
        grid=grid,
        in_specs=[
            # per-sample factors: one (sb,1,1) VMEM block per sample-block
            pl.BlockSpec((sb, 1, 1), lambda i, j: (i, 0, 0)),
            # lane-dense pixel block
            pl.BlockSpec((sb, tr, _LANE), lambda i, j: (i, j, 0)),
        ],
        out_specs=pl.BlockSpec((sb, tr, _LANE), lambda i, j: (i, j, 0)),
        compiler_params=pltpu.CompilerParams(
            dimension_semantics=("parallel", "parallel")),
        cost_estimate=cost,
        input_output_aliases=({1: 0} if donate_x else {}),
    )(noise3, x2)
    return out2.reshape(B, C, H, W)


class Intensity:
    """JAX/Pallas counterpart of the PyTorch Intensity module."""

    def __init__(self, scale):
        self.scale = scale

    def __call__(self, x, key, *, force_pallas=False):
        # glue: draw the per-sample gaussian (torch.randn equivalent)
        r = jax.random.normal(key, (x.shape[0],), dtype=jnp.float32)
        return intensity_forward(x, r, self.scale, force_pallas=force_pallas)


def _ref(x, r, scale):
    noise = (1.0 + jnp.float32(scale)
             * jnp.clip(r.astype(jnp.float32), -2.0, 2.0)).astype(x.dtype)
    return x * noise.reshape(x.shape[0], 1, 1, 1)


if __name__ == "__main__":
    key = jax.random.PRNGKey(0)
    kx, kr, kx2, kr2, kx3, kr3 = jax.random.split(key, 6)

    scale = 0.1
    module = Intensity(scale)

    # Case 1: demo shape, f32 (force the Pallas path; demo size is below the
    # XLA-fallback gate).
    B, C, H, W = 2, 4, 16, 16
    x = jax.random.normal(kx, (B, C, H, W), dtype=jnp.float32)
    out = jax.block_until_ready(module(x, kr, force_pallas=True))
    r = jax.random.normal(kr, (B,), dtype=jnp.float32)
    ref = _ref(x, r, scale)
    assert out.shape == (B, C, H, W) and out.dtype == x.dtype
    assert jnp.allclose(out, ref, atol=1e-6, rtol=1e-6)

    # Case 2: odd batch -> partial sample-block (exercises masked boundary).
    B2 = 3
    x2 = jax.random.normal(kx2, (B2, C, H, W), dtype=jnp.float32)
    r2 = jax.random.normal(kr2, (B2,), dtype=jnp.float32)
    out2 = jax.block_until_ready(
        intensity_forward(x2, r2, scale, force_pallas=True))
    assert jnp.allclose(out2, _ref(x2, r2, scale), atol=1e-6, rtol=1e-6)

    # Case 3: bf16 input -> multiply stays in bf16 (same convention as fallback).
    x3 = jax.random.normal(kx3, (B, C, H, W), dtype=jnp.bfloat16)
    r3 = jax.random.normal(kr3, (B,), dtype=jnp.float32)
    out3 = jax.block_until_ready(
        intensity_forward(x3, r3, scale, force_pallas=True))
    assert out3.dtype == jnp.bfloat16
    assert jnp.allclose(out3.astype(jnp.float32),
                        _ref(x3, r3, scale).astype(jnp.float32),
                        atol=2e-2, rtol=2e-2)

    print("KERNEL_OK")
</pallas_src>

<mosaic_0001>
module attributes {stable_mosaic.version = 11 : i64} {
  func.func @_intensity_kernel(%arg0: i32, %arg1: i32, %arg2: memref<1x1x1xf32, #tpu.memory_space<vmem>>, %arg3: memref<1x8x128xf32, #tpu.memory_space<vmem>>, %arg4: memref<1x8x128xf32, #tpu.memory_space<vmem>>) attributes {dimension_semantics = [#tpu.dimension_semantics<parallel>, #tpu.dimension_semantics<parallel>], iteration_bounds = array<i64: 2, 1>, scalar_prefetch = 0 : i64, scratch_operands = 0 : i64, tpu.core_type = #tpu.core_type<tc>, window_params = [{transform_indices = @transform_0, window_bounds = array<i64: 1, 1, 1>}, {transform_indices = @transform_1, window_bounds = array<i64: 1, 8, 128>}, {transform_indices = @transform_2, window_bounds = array<i64: 1, 8, 128>}]} {
    %c0 = arith.constant 0 : index
    %c0_0 = arith.constant 0 : index
    %c0_1 = arith.constant 0 : index
    %0 = vector.load %arg3[%c0, %c0_0, %c0_1] : memref<1x8x128xf32, #tpu.memory_space<vmem>>, vector<1x8x128xf32>
    %c0_2 = arith.constant 0 : index
    %c0_3 = arith.constant 0 : index
    %c0_4 = arith.constant 0 : index
    %1 = vector.load %arg2[%c0_2, %c0_3, %c0_4] : memref<1x1x1xf32, #tpu.memory_space<vmem>>, vector<1x1x1xf32>
    %2 = vector.broadcast %1 : vector<1x1x1xf32> to vector<1x8x128xf32>
    %3 = arith.mulf %0, %2 : vector<1x8x128xf32>
    %c0_5 = arith.constant 0 : index
    %c0_6 = arith.constant 0 : index
    %c0_7 = arith.constant 0 : index
    %4 = vector.load %arg4[%c0_5, %c0_6, %c0_7] : memref<1x8x128xf32, #tpu.memory_space<vmem>>, vector<1x8x128xf32>
    tpu.vector_store %arg4[%c0_5, %c0_6, %c0_7], %3 {strides = array<i32>} : memref<1x8x128xf32, #tpu.memory_space<vmem>>, vector<1x8x128xf32>,
    return
  }
  func.func @transform_0(%arg0: i32, %arg1: i32) -> (i32, i32, i32) {
    %c0_i32 = arith.constant 0 : i32
    %c0_i32_0 = arith.constant 0 : i32
    %c0_i32_1 = arith.constant 0 : i32
    return %arg0, %c0_i32, %c0_i32_0 : i32, i32, i32
  }
  func.func @transform_1(%arg0: i32, %arg1: i32) -> (i32, i32, i32) {
    %c0_i32 = arith.constant 0 : i32
    %c0_i32_0 = arith.constant 0 : i32
    return %arg0, %arg1, %c0_i32 : i32, i32, i32
  }
  func.func @transform_2(%arg0: i32, %arg1: i32) -> (i32, i32, i32) {
    %c0_i32 = arith.constant 0 : i32
    %c0_i32_0 = arith.constant 0 : i32
    return %arg0, %arg1, %c0_i32 : i32, i32, i32
  }
}

</mosaic_0001>

<llo_original>
// kernel: tpu_custom_call.1
$region0: #{tpu_custom_call.1}
  #allocation0 [shape = 'u32[]', space=smem, size = 0x4, offset = 0x4, fixed_abs, tag = 'smem constant byte address 0x4 - core index']
  #allocation1 [shape = 'u32[144,128]{1,0:T(1,128)}', space=vmem, size = 0x12000, scoped, tag = 'internal scratch']
  %s0 = inlined_call_operand.vmem [shape: f32[2,1,1], index: 0, kind: input, shape index: {}]
  %s1 = inlined_call_operand.hbm [shape: f32[2,8,128], index: 1, kind: input, shape index: {}]
  %s2 = inlined_call_operand.hbm [shape: f32[2,8,128], index: 2, kind: output, shape index: {}]
  %s3 = sld [smem:[#allocation0]]
  $region45: #{tpu_custom_call.1} parent=0
    _
  %s5 = ssub.s32 1, %s3
  %s6 = scalar_select 0, %s5, %s3
  $region1: #{tpu_custom_call.1} parent=0
    #allocation2 [shape = 'u8[8192]{0}', space=vmem, size = 0x2000, scoped, tag = 'input window, operand 1']
    #allocation3 [shape = 's32[2]{0}', space=sflag, size = 0x8, scoped, tag = 'scoped memory for tpu_custom_call.1']
    #allocation4 [shape = 's32[2]{0}', space=sflag, size = 0x8, scoped, tag = 'scoped memory for tpu_custom_call.1']
    #allocation5 [shape = 'u8[8192]{0}', space=vmem, size = 0x2000, scoped, tag = 'output window, operand 0']
    %7 = vsyncpa [#allocation3], 0
    %s8 = scalar_lea.sflag [#allocation3], 1
    %9 = vsyncpa %s8, 0
    %10 = vsyncpa [#allocation4], 0
    %s11 = scalar_lea.sflag [#allocation4], 1
    %12 = vsyncpa %s11, 0
    loop: start=0, step=1, limit=4
    $region2: #{tpu_custom_call.1} parent=1 // loop_pre_header
      _
    $region3: #{tpu_custom_call.1} parent=1 // loop_header
      %s14 = sphi 0, %s18
      %p15 = scmp.ge.s32.totalorder %s14, 4
      %s21 = sphi 0, %s33
      %s22 = sphi 0, %s29
      %s23 = sphi 0, %s21
      %s24 = sphi 0, %s22
      %s25 = sphi 0, %s23
      %s26 = sphi 0, %s24
      %s36 = sphi 0, %s38
      %s39 = sphi 0, %s36
      %s40 = sphi 0, %s39
      %s56 = sphi 0, %s40
      %s64 = sphi 0, %s66
      %s67 = sphi 0, %s64
      %s68 = sphi 0, %s67
      %s84 = sphi 0, %s68
      %s92 = sphi 0, %s94
      %s95 = sphi 0, %s92
      %s96 = sphi 0, %s95
      %s112 = sphi 0, %s96
    $region4: #{tpu_custom_call.1} parent=1 // loop_header_branch
      %17 = sbr.rel (%p15) target = $region8
    $region5: #{tpu_custom_call.1} parent=1 // loop_body
      %s19 = ssub.s32 %s14, 1
      %s20 = ssub.s32 %s14, 2
      %s27 = sadd.s32 1, %s22
      %p28 = scmp.ge.s32.totalorder %s27, 1
      %s29 = scalar_select %p28, 0, %s27
      %s30 = sadd.s32 1, %s21
      %s31 = scalar_select %p28, %s30, %s21
      %p32 = scmp.ge.s32.totalorder %s31, 2
      %s33 = scalar_select %p32, 0, %s31
      %s34 = ssub.s32 %s21, %s33
      %p35 = scmp.eq.s32.totalorder %s34, 0
      %s37 = sadd.s32 %s36, 1
      %s38 = scalar_select %p35, %s36, %s37
      %p41 = pneg %p35
      %p42 = scmp.eq.s32.totalorder %s14, 1
      %p43 = por %p41, %p42
      %p44 = scmp.ne.s32.totalorder %s36, %s39
      %p45 = scmp.eq.s32.totalorder %s14, 0
      %p46 = por %p44, %p45
      %p47 = scmp.ne.s32.totalorder %s36, %s39
      %p48 = scmp.eq.s32.totalorder %s19, 1
      %p49 = por %p47, %p48
      %p50 = scmp.ne.s32.totalorder %s39, %s40
      %p51 = scmp.eq.s32.totalorder %s19, 0
      %p52 = por %p50, %p51
      %p53 = scmp.ne.s32.totalorder %s39, %s40
      %p54 = scmp.eq.s32.totalorder %s20, 1
      %p55 = por %p53, %p54
      %p57 = scmp.ne.s32.totalorder %s40, %s56
      %p58 = scmp.eq.s32.totalorder %s20, 0
      %p59 = por %p57, %p58
      %s60 = ssub.s32 %s21, %s33
      %s61 = ssub.s32 %s22, %s29
      %s62 = sor.u32 %s60, %s61
      %p63 = scmp.eq.s32.totalorder %s62, 0
      %s65 = sadd.s32 %s64, 1
      %s66 = scalar_select %p63, %s64, %s65
      %p69 = pneg %p63
      %p70 = scmp.eq.s32.totalorder %s14, 1
      %p71 = por %p69, %p70
      %p72 = scmp.ne.s32.totalorder %s64, %s67
      %p73 = scmp.eq.s32.totalorder %s14, 0
      %p74 = por %p72, %p73
      %p75 = scmp.ne.s32.totalorder %s64, %s67
      %p76 = scmp.eq.s32.totalorder %s19, 1
      %p77 = por %p75, %p76
      %p78 = scmp.ne.s32.totalorder %s67, %s68
      %p79 = scmp.eq.s32.totalorder %s19, 0
      %p80 = por %p78, %p79
      %p81 = scmp.ne.s32.totalorder %s67, %s68
      %p82 = scmp.eq.s32.totalorder %s20, 1
      %p83 = por %p81, %p82
      %p85 = scmp.ne.s32.totalorder %s68, %s84
      %p86 = scmp.eq.s32.totalorder %s20, 0
      %p87 = por %p85, %p86
      %s88 = ssub.s32 %s21, %s33
      %s89 = ssub.s32 %s22, %s29
      %s90 = sor.u32 %s88, %s89
      %p91 = scmp.eq.s32.totalorder %s90, 0
      %s93 = sadd.s32 %s92, 1
      %s94 = scalar_select %p91, %s92, %s93
      %p97 = pneg %p91
      %p98 = scmp.eq.s32.totalorder %s14, 1
      %p99 = por %p97, %p98
      %p100 = scmp.ne.s32.totalorder %s92, %s95
      %p101 = scmp.eq.s32.totalorder %s14, 0
      %p102 = por %p100, %p101
      %p103 = scmp.ne.s32.totalorder %s92, %s95
      %p104 = scmp.eq.s32.totalorder %s19, 1
      %p105 = por %p103, %p104
      %p106 = scmp.ne.s32.totalorder %s95, %s96
      %p107 = scmp.eq.s32.totalorder %s19, 0
      %p108 = por %p106, %p107
      %p109 = scmp.ne.s32.totalorder %s95, %s96
      %p110 = scmp.eq.s32.totalorder %s20, 1
      %p111 = por %p109, %p110
      %p113 = scmp.ne.s32.totalorder %s96, %s112
      %p114 = scmp.eq.s32.totalorder %s20, 0
      %p115 = por %p113, %p114
      %p116 = scmp.le.s32.totalorder 1, %s14
      %p117 = scmp.lt.s32.totalorder %s14, 3
      %p118 = pnand %p116, %p117
      %p119 = pneg %p118
      // Predicated region
      $region9: #{tpu_custom_call.1} parent=5 // pred_check
        _
      $region10: #{tpu_custom_call.1} parent=5 // pred_check_branch
        %121 = sbr.rel (%p118) target = $region12
      $region11: #{tpu_custom_call.1} parent=5 // pred_region
        %s122 = ssub.s32 %s14, 1
      $region12: #{tpu_custom_call.1} parent=5 // pred_fallthru
        _
      %p123 = scmp.lt.s32.totalorder %s14, 2
      // Predicated region
      $region13: #{tpu_custom_call.1} parent=5 // pred_check
        %p124 = pneg %p123
      $region14: #{tpu_custom_call.1} parent=5 // pred_check_branch
        %126 = sbr.rel (%p124) target = $region16
      $region15: #{tpu_custom_call.1} parent=5 // pred_region
        // Predicated region
        $region17: #{tpu_custom_call.1} parent=15 // pred_check
          %p127 = pneg %p46
        $region18: #{tpu_custom_call.1} parent=15 // pred_check_branch
          %129 = sbr.rel (%p127) target = $region20
        $region19: #{tpu_custom_call.1} parent=15 // pred_region
          %p130 = scmp.lt.s32.totalorder %s21, 1
          %s131 = scalar_select %p130, %s21, 1
          %s132 = scalar_lea.vmem %s0, %s131
        $region20: #{tpu_custom_call.1} parent=15 // pred_fallthru
          _
        // Predicated region
        $region21: #{tpu_custom_call.1} parent=15 // pred_check
          %p133 = pneg %p74
        $region22: #{tpu_custom_call.1} parent=15 // pred_check_branch
          %135 = sbr.rel (%p133) target = $region24
        $region23: #{tpu_custom_call.1} parent=15 // pred_region
          %s136 = sand.u32 %s64, 1
          %s137 = scalar_lea.sflag [#allocation3], %s136
          %s138 = sand.u32 %s64, 1
          %s139 = smul.addr %s138, 8
          %s140 = scalar_lea.vmem [#allocation2], %s139
          %s142 = ssub.s32 128, 128
          %143 = vsyncadd %s137, %s142
          %s144 = sadd.s32 %s22, %s21
          %s145 = smul.addr %s144, 128
          %s146 = scalar_lea.hbm %s1, %s145
          %s148 = sshll.u32 %s140, 4
          %s149 = int_to_ptr.vmem [resolvable:$true] %s148
          %151 = dma.hbm_to_vmem [thread:$0]  %s146, 128, %s149, %s137
        $region24: #{tpu_custom_call.1} parent=15 // pred_fallthru
          _
      $region16: #{tpu_custom_call.1} parent=5 // pred_fallthru
        _
      %p152 = scmp.le.s32.totalorder 1, %s14
      %p153 = scmp.lt.s32.totalorder %s14, 3
      %p154 = pnand %p152, %p153
      %p155 = pneg %p154
      // Predicated region
      $region25: #{tpu_custom_call.1} parent=5 // pred_check
        _
      $region26: #{tpu_custom_call.1} parent=5 // pred_check_branch
        %157 = sbr.rel (%p154) target = $region28
      $region27: #{tpu_custom_call.1} parent=5 // pred_region
        %s158 = ssub.s32 %s14, 1
        %s159 = sand.u32 %s67, 1
        %s160 = scalar_lea.sflag [#allocation3], %s159
        %s161 = sand.u32 %s67, 1
        %s162 = smul.addr %s161, 8
        %s163 = scalar_lea.vmem [#allocation2], %s162
        // Predicated region
        $region29: #{tpu_custom_call.1} parent=27 // pred_check
          %p164 = pneg %p80
        $region30: #{tpu_custom_call.1} parent=27 // pred_check_branch
          %166 = sbr.rel (%p164) target = $region32
        $region31: #{tpu_custom_call.1} parent=27 // pred_region
          %167 = dma.done %s160, 128
        $region32: #{tpu_custom_call.1} parent=27 // pred_fallthru
          _
        %p168 = scmp.lt.s32.totalorder %s23, 1
        %s169 = scalar_select %p168, %s23, 1
        %s170 = scalar_lea.vmem %s0, %s169
        %p171 = pneg %p52
        %p172 = pneg %p49
        %s173 = sand.u32 %s67, 1
        %s174 = scalar_lea.sflag [#allocation3], %s173
        %s175 = sand.u32 %s67, 1
        %s176 = smul.addr %s175, 8
        %s177 = scalar_lea.vmem [#allocation2], %s176
        %p178 = pneg %p80
        %p179 = pneg %p77
        %p180 = pneg %p108
        %p181 = pneg %p105
        %s182 = sand.u32 %s95, 1
        %s183 = scalar_lea.sflag [#allocation4], %s182
        %s184 = sand.u32 %s95, 1
        %s185 = smul.addr %s184, 8
        %s186 = scalar_lea.vmem [#allocation5], %s185
        %p187 = scmp.lt.s32.totalorder %s23, 1
        %s188 = scalar_select %p187, %s23, 1
        %s189 = scalar_lea.vmem %s0, %s188
        %v190 = vld [vmem:[%s163] sm:$0xff]
        %v191 = vld [vmem:[%s189] sm:$0x1]
        %v193 = vlaneseq
        %v194 = vshrl.u32 %v193, 7
        %v195 = vsub.s32 0, %v194
        %v196 = vrot.slane %v191, %v195
        %197 = vset.pattern.permute.xlu0 0
        %198 = vperm.xlu0 %197, %v196
        %v199 = vpop.permute.xlu0 %198
        %v201 = vmul.f32 %v190, %v199
        %202 = vst [vmem:[%s186] sm:$0xff] %v201
        %s203 = sand.u32 %s95, 1
        %s204 = scalar_lea.sflag [#allocation4], %s203
        %s205 = sand.u32 %s95, 1
        %s206 = smul.addr %s205, 8
        %s207 = scalar_lea.vmem [#allocation5], %s206
        // Predicated region
        $region33: #{tpu_custom_call.1} parent=27 // pred_check
          %p208 = pneg %p105
        $region34: #{tpu_custom_call.1} parent=27 // pred_check_branch
          %210 = sbr.rel (%p208) target = $region36
        $region35: #{tpu_custom_call.1} parent=27 // pred_region
          %s212 = ssub.s32 128, 128
          %213 = vsyncadd %s204, %s212
          %s214 = sadd.s32 %s24, %s23
          %s215 = smul.addr %s214, 128
          %s216 = scalar_lea.hbm %s2, %s215
          %s218 = sshll.u32 %s207, 4
          %s219 = int_to_ptr.vmem [resolvable:$true] %s218
          %221 = dma.vmem_to_hbm [thread:$0]  %s219, 128, %s216, %s204
        $region36: #{tpu_custom_call.1} parent=27 // pred_fallthru
          _
      $region28: #{tpu_custom_call.1} parent=5 // pred_fallthru
        _
      %p222 = scmp.le.s32.totalorder 2, %s14
      // Predicated region
      $region37: #{tpu_custom_call.1} parent=5 // pred_check
        %p223 = pneg %p222
      $region38: #{tpu_custom_call.1} parent=5 // pred_check_branch
        %225 = sbr.rel (%p223) target = $region40
      $region39: #{tpu_custom_call.1} parent=5 // pred_region
        %s226 = ssub.s32 %s14, 2
        // Predicated region
        $region41: #{tpu_custom_call.1} parent=39 // pred_check
          %p227 = pneg %p111
        $region42: #{tpu_custom_call.1} parent=39 // pred_check_branch
          %229 = sbr.rel (%p227) target = $region44
        $region43: #{tpu_custom_call.1} parent=39 // pred_region
          %s230 = sand.u32 %s96, 1
          %s231 = scalar_lea.sflag [#allocation4], %s230
          %s232 = sand.u32 %s96, 1
          %s233 = smul.addr %s232, 8
          %s234 = scalar_lea.vmem [#allocation5], %s233
          %235 = dma.done %s231, 128
        $region44: #{tpu_custom_call.1} parent=39 // pred_fallthru
          _
      $region40: #{tpu_custom_call.1} parent=5 // pred_fallthru
        _
    $region6: #{tpu_custom_call.1} parent=1 // loop_footer
      %s18 = sadd.s32 1, %s14
    $region7: #{tpu_custom_call.1} parent=1 // loop_footer_branch
      %13 = sbr.rel target = $region3
    $region8: #{tpu_custom_call.1} parent=1 // loop_exit
      _
    %236 = vsyncpa [#allocation3], 1
    %s237 = scalar_lea.sflag [#allocation3], 1
    %238 = vsyncpa %s237, 1
    %239 = vsyncpa [#allocation4], 1
    %s240 = scalar_lea.sflag [#allocation4], 1
    %241 = vsyncpa %s240, 1

</llo_original>
